<compile_context>
chip_gen: v7x
topology: tpu7x:2x2x1
jax: 0.10.0
libtpu: 0.0.40
codegen_flags: <defaults>
</compile_context>

<pallas_src>
import jax
import jax.numpy as jnp
from jax.experimental import pallas as pl
from jax.experimental.pallas import tpu as pltpu


_MIB = 1024 * 1024


def _tpu_budgets():
    """Generation-aware VMEM budgets + grid-step preferences."""
    cap = 64 * _MIB
    try:
        cap = int(pltpu.get_tpu_info().vmem_capacity_bytes)
    except Exception:
        pass  # be conservative if the query is unavailable
    if cap >= 128 * _MIB:
        # v5e / v6e: 128 MiB physical VMEM, single TensorCore per chip.
        return dict(data_budget=96 * _MIB, vmem_limit=110 * _MIB,
                    min_steps=1, even_steps=False)
    # v7x-like: 64 MiB VMEM per TensorCore, 2 TensorCores per chip -> prefer
    # an even number of grid steps so the parallel axis shards evenly.
    return dict(data_budget=40 * _MIB, vmem_limit=48 * _MIB,
                min_steps=2, even_steps=True)


# --------------------------------------------------------------------------
# Fused (fast) path: whole (bblk, C, HW) slab per grid step.
# --------------------------------------------------------------------------

def _se_fused_kernel(x_ref, w1t_ref, w2t_ref, o_ref):
    # x_ref block: (Bblk, C, HW) -- channels on sublanes, spatial on lanes.

    # Squeeze: global average pool = lane reduction over HW, f32 accumulation.
    pooled = jnp.mean(x_ref[...], axis=-1, dtype=jnp.float32)          # (Bblk, C)

    # Excitation: FC -> ReLU -> FC -> sigmoid (bias-free).  Negligible next
    # to the HBM-bound scale pass, so no MXU-shape heroics here.
    h = jnp.dot(pooled, w1t_ref[...], preferred_element_type=jnp.float32)
    h = jnp.maximum(h, 0.0)
    y = jax.nn.sigmoid(
        jnp.dot(h, w2t_ref[...], preferred_element_type=jnp.float32))   # (Bblk, C)

    # Scale: lane-broadcast each channel gate over HW.  x_ref is re-read here
    # (not bound once above) so the big slab is never live across the
    # excitation section and Mosaic can strip-mine the pass cleanly.
    # NOTE: for bf16 inputs the gate is applied in bf16 (PyTorch applies the
    # multiply in f32) -- tolerance-level difference only.
    gate = y.astype(o_ref.dtype)[:, :, None]                            # (Bblk, C, 1)
    o_ref[...] = (x_ref[...] * gate).astype(o_ref.dtype)


def _pick_bblk(B, C, HW, itemsize, data_budget, min_steps, even_steps):
    """Largest batch block whose double-buffered in+out slabs fit the budget.

    Only exact divisors of B are considered, so no padded rows ever enter the
    pooled mean.  Returns None if even a single-batch slab does not fit
    (caller falls back to the HW-tiled path)."""
    per_b = 4 * C * HW * itemsize          # 2x in + 2x out double buffers
    fits = [d for d in range(1, B + 1) if B % d == 0 and d * per_b <= data_budget]
    if not fits:
        return None
    preferred = [d for d in fits
                 if (B // d) >= min_steps
                 and (not even_steps or (B // d) % 2 == 0)]
    return max(preferred) if preferred else max(fits)


def _se_fused(x3, w1, w2, *, bblk, vmem_limit):
    B, C, HW = x3.shape
    hidden = w1.shape[0]
    assert B % bblk == 0, "batch block must divide B exactly"
    itemsize = jnp.dtype(x3.dtype).itemsize

    # Tiny weight transposes (C x hidden) so the kernel does plain row-major
    # (Bblk,C)@(C,hid) and (Bblk,hid)@(hid,C) matmuls.
    w1_t = jnp.transpose(w1)   # (C, hidden)
    w2_t = jnp.transpose(w2)   # (hidden, C)

    cost = pl.CostEstimate(
        flops=2 * B * C * HW + 4 * B * C * hidden,
        transcendentals=B * C,
        bytes_accessed=2 * B * C * HW * itemsize + 2 * C * hidden * 4,
    )

    return pl.pallas_call(
        _se_fused_kernel,
        out_shape=jax.ShapeDtypeStruct((B, C, HW), x3.dtype),
        grid_spec=pltpu.PrefetchScalarGridSpec(
            num_scalar_prefetch=0,
            grid=(B // bblk,),
            in_specs=[
                pl.BlockSpec((bblk, C, HW), lambda b: (b, 0, 0)),
                pl.BlockSpec((C, hidden), lambda b: (0, 0)),
                pl.BlockSpec((hidden, C), lambda b: (0, 0)),
            ],
            out_specs=pl.BlockSpec((bblk, C, HW), lambda b: (b, 0, 0)),
        ),
        compiler_params=pltpu.CompilerParams(
            dimension_semantics=("parallel",),
            vmem_limit_bytes=vmem_limit),
        cost_estimate=cost,
    )(x3, w1_t, w2_t)


# --------------------------------------------------------------------------
# HW-tiled fallback (large feature maps / v7x 64 MiB VMEM): two streaming
# passes over x.  Phase 1 accumulates per-channel spatial sums, phase 2
# re-streams x to apply the gate.
# --------------------------------------------------------------------------

def _pool_sum_kernel(x_ref, sum_ref):
    # Grid: (B, n_hw_tiles); the hw axis is "arbitrary" so sum_ref (1, C, 1)
    # stays resident in VMEM across the spatial tiles.
    @pl.when(pl.program_id(1) == 0)
    def _():
        sum_ref[...] = jnp.zeros_like(sum_ref)
    sum_ref[...] += jnp.sum(x_ref[...], axis=-1, keepdims=True,
                            dtype=jnp.float32)


def _scale_kernel(x_ref, gate_ref, o_ref):
    # x_ref: (1, C, hw_t); gate_ref: (1, C, 1) f32 -> lane-broadcast multiply.
    gate = gate_ref[...].astype(o_ref.dtype)
    o_ref[...] = (x_ref[...] * gate).astype(o_ref.dtype)


def _pick_hw_tile(HW, C, itemsize, data_budget):
    """Largest 128-aligned spatial tile dividing HW that fits the budget.
    Fails loudly rather than emitting a block that cannot fit in VMEM."""
    per_col = 4 * C * itemsize             # 2x in + 2x out double buffers
    best = 0
    k = 1
    while 128 * k <= HW:
        hw_t = 128 * k
        if HW % hw_t == 0 and hw_t * per_col <= data_budget:
            best = hw_t
        k += 1
    if best == 0:
        raise ValueError(
            f"SELayer Pallas kernel: cannot tile HW={HW} (C={C}, "
            f"itemsize={itemsize}) into 128-aligned spatial tiles within the "
            f"{data_budget >> 20} MiB VMEM data budget "
            f"(HW must be a multiple of 128 for the tiled fallback).")
    return best


def _excite(pooled, w1, w2):
    # Excitation on (B, C) is microscopic -> plain JAX is fine here.
    h = jnp.maximum(pooled @ w1.T, 0.0)
    return jax.nn.sigmoid(h @ w2.T)


def _se_hw_tiled(x3, w1, w2, cfg):
    B, C, HW = x3.shape
    itemsize = jnp.dtype(x3.dtype).itemsize
    hw_t = _pick_hw_tile(HW, C, itemsize, cfg["data_budget"])
    n_hw = HW // hw_t

    # Phase 1: per-(batch, channel) spatial sums.
    sums = pl.pallas_call(
        _pool_sum_kernel,
        out_shape=jax.ShapeDtypeStruct((B, C, 1), jnp.float32),
        grid_spec=pltpu.PrefetchScalarGridSpec(
            num_scalar_prefetch=0,
            grid=(B, n_hw),
            in_specs=[pl.BlockSpec((1, C, hw_t), lambda b, t: (b, 0, t))],
            out_specs=pl.BlockSpec((1, C, 1), lambda b, t: (b, 0, 0)),
        ),
        compiler_params=pltpu.CompilerParams(
            dimension_semantics=("parallel", "arbitrary"),
            vmem_limit_bytes=cfg["vmem_limit"]),
    )(x3)

    pooled = sums[:, :, 0] / jnp.float32(HW)                       # (B, C)
    gate = _excite(pooled, w1, w2).astype(jnp.float32)[:, :, None]  # (B, C, 1)

    # Phase 2: re-stream x and apply the per-channel gate.
    return pl.pallas_call(
        _scale_kernel,
        out_shape=jax.ShapeDtypeStruct((B, C, HW), x3.dtype),
        grid_spec=pltpu.PrefetchScalarGridSpec(
            num_scalar_prefetch=0,
            grid=(B, n_hw),
            in_specs=[
                pl.BlockSpec((1, C, hw_t), lambda b, t: (b, 0, t)),
                pl.BlockSpec((1, C, 1), lambda b, t: (b, 0, 0)),
            ],
            out_specs=pl.BlockSpec((1, C, hw_t), lambda b, t: (b, 0, t)),
        ),
        compiler_params=pltpu.CompilerParams(
            dimension_semantics=("parallel", "parallel"),
            vmem_limit_bytes=cfg["vmem_limit"]),
    )(x3, gate)


# --------------------------------------------------------------------------
# Public entry point.
# --------------------------------------------------------------------------

def se_layer(x, w1, w2):
    """x: (B, C, H, W) NCHW; w1: (C//r, C); w2: (C, C//r) (PyTorch layout)."""
    B, C, H, W = x.shape
    hidden = w1.shape[0]
    assert w1.shape == (hidden, C) and w2.shape == (C, hidden)
    HW = H * W

    cfg = _tpu_budgets()
    itemsize = jnp.dtype(x.dtype).itemsize

    # Pure reshape (no data movement): keep native NCHW order, just flatten
    # spatial dims so HW lands on the lane axis inside the kernel.
    # (If HW < 128 the output stores are partial, but such tensors are tiny.)
    x3 = x.reshape(B, C, HW)

    bblk = _pick_bblk(B, C, HW, itemsize,
                      cfg["data_budget"], cfg["min_steps"], cfg["even_steps"])
    if bblk is not None:
        out3 = _se_fused(x3, w1, w2, bblk=bblk, vmem_limit=cfg["vmem_limit"])
    else:
        out3 = _se_hw_tiled(x3, w1, w2, cfg)

    return out3.reshape(B, C, H, W)   # pure reshape back, no copy


def _reference(x, w1, w2):
    # Pure-JAX reference replicating the PyTorch forward.
    pooled = jnp.mean(x, axis=(2, 3))                         # (B, C)
    h = jnp.maximum(pooled @ w1.T, 0.0)                       # (B, hidden)
    y = jax.nn.sigmoid(h @ w2.T)                              # (B, C)
    return x * y[:, :, None, None]


if __name__ == "__main__":
    # Shapes consistent with SELayer(channel=64, reduction=16) -> hidden = 4.
    B, C, H, W = 2, 64, 16, 16
    reduction = 16
    hidden = C // reduction

    key = jax.random.PRNGKey(0)
    kx, k1, k2 = jax.random.split(key, 3)

    x = jax.random.normal(kx, (B, C, H, W), dtype=jnp.float32)

    # Deterministic kaiming_normal(fan_in, relu) init for the two bias-free
    # Linear layers: std = sqrt(2 / fan_in)  (matches weight_init).
    w1 = jax.random.normal(k1, (hidden, C), dtype=jnp.float32) * jnp.sqrt(2.0 / C)
    w2 = jax.random.normal(k2, (C, hidden), dtype=jnp.float32) * jnp.sqrt(2.0 / hidden)

    ref = _reference(x, w1, w2)

    # Fast fused path.
    out = jax.block_until_ready(se_layer(x, w1, w2))
    assert out.shape == x.shape
    assert jnp.allclose(out, ref, atol=1e-5, rtol=1e-5), "fused path mismatch"

    # Also exercise the HW-tiled fallback (large feature map / v7x) with a
    # deliberately tiny budget so the spatial reduction spans multiple tiles.
    tiny_cfg = dict(data_budget=4 * C * 128 * 4, vmem_limit=48 * _MIB,
                    min_steps=1, even_steps=False)
    out_tiled = _se_hw_tiled(x.reshape(B, C, H * W), w1, w2, tiny_cfg)
    out_tiled = jax.block_until_ready(out_tiled).reshape(B, C, H, W)
    assert jnp.allclose(out_tiled, ref, atol=1e-5, rtol=1e-5), "tiled path mismatch"

    print("KERNEL_OK")
</pallas_src>

<mosaic_0001>
module attributes {stable_mosaic.version = 11 : i64} {
  func.func @_se_fused_kernel(%arg0: i32, %arg1: memref<1x64x256xf32, #tpu.memory_space<vmem>>, %arg2: memref<64x4xf32, #tpu.memory_space<vmem>>, %arg3: memref<4x64xf32, #tpu.memory_space<vmem>>, %arg4: memref<1x64x256xf32, #tpu.memory_space<vmem>>) attributes {dimension_semantics = [#tpu.dimension_semantics<parallel>], iteration_bounds = array<i64: 2>, scalar_prefetch = 0 : i64, scratch_operands = 0 : i64, tpu.core_type = #tpu.core_type<tc>, window_params = [{transform_indices = @transform_0, window_bounds = array<i64: 1, 64, 256>}, {pipeline_mode = #tpu.pipeline_mode<synchronous>, transform_indices = @transform_1, window_bounds = array<i64: 64, 4>}, {pipeline_mode = #tpu.pipeline_mode<synchronous>, transform_indices = @transform_2, window_bounds = array<i64: 4, 64>}, {transform_indices = @transform_3, window_bounds = array<i64: 1, 64, 256>}]} {
    %c0 = arith.constant 0 : index
    %c0_0 = arith.constant 0 : index
    %c0_1 = arith.constant 0 : index
    %0 = vector.load %arg1[%c0, %c0_0, %c0_1] : memref<1x64x256xf32, #tpu.memory_space<vmem>>, vector<1x64x256xf32>
    %cst = arith.constant dense<0.000000e+00> : vector<1x64xf32>
    %1 = vector.multi_reduction <add>, %0, %cst [2] : vector<1x64x256xf32> to vector<1x64xf32>
    %cst_2 = arith.constant 2.560000e+02 : f32
    %2 = vector.broadcast %cst_2 : f32 to vector<1x64xf32>
    %3 = arith.divf %1, %2 : vector<1x64xf32>
    %c0_3 = arith.constant 0 : index
    %c0_4 = arith.constant 0 : index
    %4 = vector.load %arg2[%c0_3, %c0_4] : memref<64x4xf32, #tpu.memory_space<vmem>>, vector<64x4xf32>
    %cst_5 = arith.constant dense<0.000000e+00> : vector<1x4xf32>
    %5 = tpu.matmul %3, %4, %cst_5 {dimension_numbers = #tpu.dot_dimension_numbers<[1], [0], [0], [1], [0, 0, 1, 1], [], []>} : vector<1x64xf32>, vector<64x4xf32>, vector<1x4xf32> -> vector<1x4xf32>
    %cst_6 = arith.constant 0.000000e+00 : f32
    %6 = vector.broadcast %cst_6 : f32 to vector<1x4xf32>
    %7 = arith.maximumf %5, %6 : vector<1x4xf32>
    %c0_7 = arith.constant 0 : index
    %c0_8 = arith.constant 0 : index
    %8 = vector.load %arg3[%c0_7, %c0_8] : memref<4x64xf32, #tpu.memory_space<vmem>>, vector<4x64xf32>
    %cst_9 = arith.constant dense<0.000000e+00> : vector<1x64xf32>
    %9 = tpu.matmul %7, %8, %cst_9 {dimension_numbers = #tpu.dot_dimension_numbers<[1], [0], [0], [1], [0, 0, 1, 1], [], []>} : vector<1x4xf32>, vector<4x64xf32>, vector<1x64xf32> -> vector<1x64xf32>
    %10 = arith.negf %9 : vector<1x64xf32>
    %11 = math.exp %10 : vector<1x64xf32>
    %cst_10 = arith.constant 1.000000e+00 : f32
    %12 = vector.broadcast %cst_10 : f32 to vector<1x64xf32>
    %13 = arith.addf %12, %11 : vector<1x64xf32>
    %14 = arith.divf %12, %13 : vector<1x64xf32>
    %15 = vector.shape_cast %14 : vector<1x64xf32> to vector<1x64x1xf32>
    %c0_11 = arith.constant 0 : index
    %c0_12 = arith.constant 0 : index
    %c0_13 = arith.constant 0 : index
    %16 = vector.load %arg1[%c0_11, %c0_12, %c0_13] : memref<1x64x256xf32, #tpu.memory_space<vmem>>, vector<1x64x256xf32>
    %17 = vector.broadcast %15 : vector<1x64x1xf32> to vector<1x64x256xf32>
    %18 = arith.mulf %16, %17 : vector<1x64x256xf32>
    %c0_14 = arith.constant 0 : index
    %c0_15 = arith.constant 0 : index
    %c0_16 = arith.constant 0 : index
    %19 = vector.load %arg4[%c0_14, %c0_15, %c0_16] : memref<1x64x256xf32, #tpu.memory_space<vmem>>, vector<1x64x256xf32>
    tpu.vector_store %arg4[%c0_14, %c0_15, %c0_16], %18 {strides = array<i32>} : memref<1x64x256xf32, #tpu.memory_space<vmem>>, vector<1x64x256xf32>,
    return
  }
  func.func @transform_0(%arg0: i32) -> (i32, i32, i32) {
    %c0_i32 = arith.constant 0 : i32
    %c0_i32_0 = arith.constant 0 : i32
    %c0_i32_1 = arith.constant 0 : i32
    return %arg0, %c0_i32, %c0_i32_0 : i32, i32, i32
  }
  func.func @transform_1(%arg0: i32) -> (i32, i32) {
    %c0_i32 = arith.constant 0 : i32
    %c0_i32_0 = arith.constant 0 : i32
    %c0_i32_1 = arith.constant 0 : i32
    return %c0_i32, %c0_i32_0 : i32, i32
  }
  func.func @transform_2(%arg0: i32) -> (i32, i32) {
    %c0_i32 = arith.constant 0 : i32
    %c0_i32_0 = arith.constant 0 : i32
    %c0_i32_1 = arith.constant 0 : i32
    return %c0_i32, %c0_i32_0 : i32, i32
  }
  func.func @transform_3(%arg0: i32) -> (i32, i32, i32) {
    %c0_i32 = arith.constant 0 : i32
    %c0_i32_0 = arith.constant 0 : i32
    %c0_i32_1 = arith.constant 0 : i32
    return %arg0, %c0_i32, %c0_i32_0 : i32, i32, i32
  }
}

</mosaic_0001>

<llo_original>
// kernel: tpu_custom_call.1
$region0: #{tpu_custom_call.1}
  #allocation0 [shape = 'u32[]', space=smem, size = 0x4, offset = 0x4, fixed_abs, tag = 'smem constant byte address 0x4 - core index']
  #allocation1 [shape = 'u32[144,128]{1,0:T(1,128)}', space=vmem, size = 0x12000, scoped, tag = 'internal scratch']
  %s0 = inlined_call_operand.hbm [shape: f32[2,64,256], index: 0, kind: input, shape index: {}]
  %s1 = inlined_call_operand.vmem [shape: f32[64,4], index: 1, kind: input, shape index: {}]
  %s2 = inlined_call_operand.vmem [shape: f32[4,64], index: 2, kind: input, shape index: {}]
  %s3 = inlined_call_operand.hbm [shape: f32[2,64,256], index: 3, kind: output, shape index: {}]
  %s4 = sld [smem:[#allocation0]]
  $region49: #{tpu_custom_call.1} parent=0
    _
  %s6 = ssub.s32 1, %s4
  %s7 = scalar_select 0, %s6, %s4
  $region1: #{tpu_custom_call.1} parent=0
    #allocation2 [shape = 'u8[131072]{0}', space=vmem, size = 0x20000, scoped, tag = 'input window, operand 0']
    #allocation3 [shape = 's32[2]{0}', space=sflag, size = 0x8, scoped, tag = 'scoped memory for tpu_custom_call.1']
    #allocation4 [shape = 's32[2]{0}', space=sflag, size = 0x8, scoped, tag = 'scoped memory for tpu_custom_call.1']
    #allocation5 [shape = 'u8[131072]{0}', space=vmem, size = 0x20000, scoped, tag = 'output window, operand 0']
    %8 = vsyncpa [#allocation3], 0
    %s9 = scalar_lea.sflag [#allocation3], 1
    %10 = vsyncpa %s9, 0
    %11 = vsyncpa [#allocation4], 0
    %s12 = scalar_lea.sflag [#allocation4], 1
    %13 = vsyncpa %s12, 0
    loop: start=0, step=1, limit=4
    $region2: #{tpu_custom_call.1} parent=1 // loop_pre_header
      _
    $region3: #{tpu_custom_call.1} parent=1 // loop_header
      %s15 = sphi 0, %s19
      %p16 = scmp.ge.s32.totalorder %s15, 4
      %s25 = sphi 0, %s27
      %s28 = sphi 0, %s25
      %s29 = sphi 0, %s28
      %s45 = sphi 0, %s29
      %s49 = sphi 0, %s49
      %s51 = sphi 0, %s49
      %s52 = sphi 0, %s51
      %s66 = sphi 0, %s52
      %s70 = sphi 0, %s70
      %s72 = sphi 0, %s70
      %s73 = sphi 0, %s72
      %s87 = sphi 0, %s73
      %s93 = sphi 0, %s95
      %s96 = sphi 0, %s93
      %s97 = sphi 0, %s96
      %s113 = sphi 0, %s97
    $region4: #{tpu_custom_call.1} parent=1 // loop_header_branch
      %18 = sbr.rel (%p16) target = $region8
    $region5: #{tpu_custom_call.1} parent=1 // loop_body
      %s20 = ssub.s32 %s15, 1
      %s21 = ssub.s32 %s15, 2
      %s22 = sadd.s32 %s15, 1
      %s23 = ssub.s32 %s15, %s22
      %p24 = scmp.eq.s32.totalorder %s23, 0
      %s26 = sadd.s32 %s25, 1
      %s27 = scalar_select %p24, %s25, %s26
      %p30 = pneg %p24
      %p31 = scmp.eq.s32.totalorder %s15, 1
      %p32 = por %p30, %p31
      %p33 = scmp.ne.s32.totalorder %s25, %s28
      %p34 = scmp.eq.s32.totalorder %s15, 0
      %p35 = por %p33, %p34
      %p36 = scmp.ne.s32.totalorder %s25, %s28
      %p37 = scmp.eq.s32.totalorder %s20, 1
      %p38 = por %p36, %p37
      %p39 = scmp.ne.s32.totalorder %s28, %s29
      %p40 = scmp.eq.s32.totalorder %s20, 0
      %p41 = por %p39, %p40
      %p42 = scmp.ne.s32.totalorder %s28, %s29
      %p43 = scmp.eq.s32.totalorder %s21, 1
      %p44 = por %p42, %p43
      %p46 = scmp.ne.s32.totalorder %s29, %s45
      %p47 = scmp.eq.s32.totalorder %s21, 0
      %p48 = por %p46, %p47
      %s50 = sadd.s32 %s49, 1
      %p53 = scmp.eq.s32.totalorder %s15, 1
      %p54 = scmp.ne.s32.totalorder %s49, %s51
      %p55 = scmp.eq.s32.totalorder %s15, 0
      %p56 = por %p54, %p55
      %p57 = scmp.ne.s32.totalorder %s49, %s51
      %p58 = scmp.eq.s32.totalorder %s20, 1
      %p59 = por %p57, %p58
      %p60 = scmp.ne.s32.totalorder %s51, %s52
      %p61 = scmp.eq.s32.totalorder %s20, 0
      %p62 = por %p60, %p61
      %p63 = scmp.ne.s32.totalorder %s51, %s52
      %p64 = scmp.eq.s32.totalorder %s21, 1
      %p65 = por %p63, %p64
      %p67 = scmp.ne.s32.totalorder %s52, %s66
      %p68 = scmp.eq.s32.totalorder %s21, 0
      %p69 = por %p67, %p68
      %s71 = sadd.s32 %s70, 1
      %p74 = scmp.eq.s32.totalorder %s15, 1
      %p75 = scmp.ne.s32.totalorder %s70, %s72
      %p76 = scmp.eq.s32.totalorder %s15, 0
      %p77 = por %p75, %p76
      %p78 = scmp.ne.s32.totalorder %s70, %s72
      %p79 = scmp.eq.s32.totalorder %s20, 1
      %p80 = por %p78, %p79
      %p81 = scmp.ne.s32.totalorder %s72, %s73
      %p82 = scmp.eq.s32.totalorder %s20, 0
      %p83 = por %p81, %p82
      %p84 = scmp.ne.s32.totalorder %s72, %s73
      %p85 = scmp.eq.s32.totalorder %s21, 1
      %p86 = por %p84, %p85
      %p88 = scmp.ne.s32.totalorder %s73, %s87
      %p89 = scmp.eq.s32.totalorder %s21, 0
      %p90 = por %p88, %p89
      %s91 = ssub.s32 %s15, %s22
      %p92 = scmp.eq.s32.totalorder %s91, 0
      %s94 = sadd.s32 %s93, 1
      %s95 = scalar_select %p92, %s93, %s94
      %p98 = pneg %p92
      %p99 = scmp.eq.s32.totalorder %s15, 1
      %p100 = por %p98, %p99
      %p101 = scmp.ne.s32.totalorder %s93, %s96
      %p102 = scmp.eq.s32.totalorder %s15, 0
      %p103 = por %p101, %p102
      %p104 = scmp.ne.s32.totalorder %s93, %s96
      %p105 = scmp.eq.s32.totalorder %s20, 1
      %p106 = por %p104, %p105
      %p107 = scmp.ne.s32.totalorder %s96, %s97
      %p108 = scmp.eq.s32.totalorder %s20, 0
      %p109 = por %p107, %p108
      %p110 = scmp.ne.s32.totalorder %s96, %s97
      %p111 = scmp.eq.s32.totalorder %s21, 1
      %p112 = por %p110, %p111
      %p114 = scmp.ne.s32.totalorder %s97, %s113
      %p115 = scmp.eq.s32.totalorder %s21, 0
      %p116 = por %p114, %p115
      %p117 = scmp.le.s32.totalorder 1, %s15
      %p118 = scmp.lt.s32.totalorder %s15, 3
      %p119 = pnand %p117, %p118
      %p120 = pneg %p119
      // Predicated region
      $region9: #{tpu_custom_call.1} parent=5 // pred_check
        _
      $region10: #{tpu_custom_call.1} parent=5 // pred_check_branch
        %122 = sbr.rel (%p119) target = $region12
      $region11: #{tpu_custom_call.1} parent=5 // pred_region
        %s123 = ssub.s32 %s15, 1
        // Predicated region
        $region13: #{tpu_custom_call.1} parent=11 // pred_check
          %p124 = pneg %p62
        $region14: #{tpu_custom_call.1} parent=11 // pred_check_branch
          %126 = sbr.rel (%p124) target = $region16
        $region15: #{tpu_custom_call.1} parent=11 // pred_region
          _
        $region16: #{tpu_custom_call.1} parent=11 // pred_fallthru
          _
        // Predicated region
        $region17: #{tpu_custom_call.1} parent=11 // pred_check
          %p127 = pneg %p83
        $region18: #{tpu_custom_call.1} parent=11 // pred_check_branch
          %129 = sbr.rel (%p127) target = $region20
        $region19: #{tpu_custom_call.1} parent=11 // pred_region
          _
        $region20: #{tpu_custom_call.1} parent=11 // pred_fallthru
          _
      $region12: #{tpu_custom_call.1} parent=5 // pred_fallthru
        _
      %p130 = scmp.lt.s32.totalorder %s15, 2
      // Predicated region
      $region21: #{tpu_custom_call.1} parent=5 // pred_check
        %p131 = pneg %p130
      $region22: #{tpu_custom_call.1} parent=5 // pred_check_branch
        %133 = sbr.rel (%p131) target = $region24
      $region23: #{tpu_custom_call.1} parent=5 // pred_region
        // Predicated region
        $region25: #{tpu_custom_call.1} parent=23 // pred_check
          %p134 = pneg %p35
        $region26: #{tpu_custom_call.1} parent=23 // pred_check_branch
          %136 = sbr.rel (%p134) target = $region28
        $region27: #{tpu_custom_call.1} parent=23 // pred_region
          %s137 = sand.u32 %s25, 1
          %s138 = scalar_lea.sflag [#allocation3], %s137
          %s139 = sand.u32 %s25, 1
          %s140 = smul.addr %s139, 128
          %s141 = scalar_lea.vmem [#allocation2], %s140
          %s143 = ssub.s32 2048, 2048
          %144 = vsyncadd %s138, %s143
          %s145 = smul.addr %s15, 16
          %s146 = smul.addr %s145, 128
          %s147 = scalar_lea.hbm %s0, %s146
          %s148 = sshll.u32 %s141, 4
          %s149 = int_to_ptr.vmem [resolvable:$true] %s148
          %154 = dma.hbm_to_vmem [thread:$0]  %s147, 2048, %s149, %s138, 256, 256, 16
        $region28: #{tpu_custom_call.1} parent=23 // pred_fallthru
          _
      $region24: #{tpu_custom_call.1} parent=5 // pred_fallthru
        _
      %p155 = scmp.le.s32.totalorder 1, %s15
      %p156 = scmp.lt.s32.totalorder %s15, 3
      %p157 = pnand %p155, %p156
      %p158 = pneg %p157
      // Predicated region
      $region29: #{tpu_custom_call.1} parent=5 // pred_check
        _
      $region30: #{tpu_custom_call.1} parent=5 // pred_check_branch
        %160 = sbr.rel (%p157) target = $region32
      $region31: #{tpu_custom_call.1} parent=5 // pred_region
        %s161 = ssub.s32 %s15, 1
        %s162 = sand.u32 %s28, 1
        %s163 = scalar_lea.sflag [#allocation3], %s162
        %s164 = sand.u32 %s28, 1
        %s165 = smul.addr %s164, 128
        %s166 = scalar_lea.vmem [#allocation2], %s165
        // Predicated region
        $region33: #{tpu_custom_call.1} parent=31 // pred_check
          %p167 = pneg %p41
        $region34: #{tpu_custom_call.1} parent=31 // pred_check_branch
          %169 = sbr.rel (%p167) target = $region36
        $region35: #{tpu_custom_call.1} parent=31 // pred_region
          %170 = dma.done %s163, 2048
        $region36: #{tpu_custom_call.1} parent=31 // pred_fallthru
          _
        %s171 = sand.u32 %s28, 1
        %s172 = scalar_lea.sflag [#allocation3], %s171
        %s173 = sand.u32 %s28, 1
        %s174 = smul.addr %s173, 128
        %s175 = scalar_lea.vmem [#allocation2], %s174
        %p176 = pneg %p41
        %p177 = pneg %p38
        %p178 = pneg %p62
        %p179 = pneg %p59
        %p180 = pneg %p83
        %p181 = pneg %p80
        %p182 = pneg %p109
        %p183 = pneg %p106
        %s184 = sand.u32 %s96, 1
        %s185 = scalar_lea.sflag [#allocation4], %s184
        %s186 = sand.u32 %s96, 1
        %s187 = smul.addr %s186, 128
        %s188 = scalar_lea.vmem [#allocation5], %s187
        %v189 = vld [vmem:[%s166] sm:$0xff]
        %v190 = vld [vmem:[%s166 + $0x8] sm:$0xff]
        %v191 = vld [vmem:[%s166 + $0x10] sm:$0xff]
        %v192 = vld [vmem:[%s166 + $0x18] sm:$0xff]
        %v193 = vld [vmem:[%s166 + $0x20] sm:$0xff]
        %v194 = vld [vmem:[%s166 + $0x28] sm:$0xff]
        %v195 = vld [vmem:[%s166 + $0x30] sm:$0xff]
        %v196 = vld [vmem:[%s166 + $0x38] sm:$0xff]
        %v197 = vld [vmem:[%s166 + $0x40] sm:$0xff]
        %v198 = vld [vmem:[%s166 + $0x48] sm:$0xff]
        %v199 = vld [vmem:[%s166 + $0x50] sm:$0xff]
        %v200 = vld [vmem:[%s166 + $0x58] sm:$0xff]
        %v201 = vld [vmem:[%s166 + $0x60] sm:$0xff]
        %v202 = vld [vmem:[%s166 + $0x68] sm:$0xff]
        %v203 = vld [vmem:[%s166 + $0x70] sm:$0xff]
        %v204 = vld [vmem:[%s166 + $0x78] sm:$0xff]
        %v205 = vadd.f32 %v189, %v190
        %206 = vadd.xlane.f32.xlu0 %v205
        %v207 = vpop.xlane.xlu0 %206
        %v208 = vadd.f32 %v191, %v192
        %209 = vadd.xlane.f32.xlu0 %v208
        %v210 = vpop.xlane.xlu0 %209
        %v211 = vadd.f32 %v193, %v194
        %212 = vadd.xlane.f32.xlu0 %v211
        %v213 = vpop.xlane.xlu0 %212
        %v214 = vadd.f32 %v195, %v196
        %215 = vadd.xlane.f32.xlu0 %v214
        %v216 = vpop.xlane.xlu0 %215
        %v217 = vadd.f32 %v197, %v198
        %218 = vadd.xlane.f32.xlu0 %v217
        %v219 = vpop.xlane.xlu0 %218
        %v220 = vadd.f32 %v199, %v200
        %221 = vadd.xlane.f32.xlu0 %v220
        %v222 = vpop.xlane.xlu0 %221
        %v223 = vadd.f32 %v201, %v202
        %224 = vadd.xlane.f32.xlu0 %v223
        %v225 = vpop.xlane.xlu0 %224
        %v226 = vadd.f32 %v203, %v204
        %227 = vadd.xlane.f32.xlu0 %v226
        %v228 = vpop.xlane.xlu0 %227
        %v229 = vrcp.pop 256.0
        %v230 = vmul.f32 %v207, %v229
        %v231 = vmul.f32 %v210, %v229
        %v232 = vmul.f32 %v213, %v229
        %v233 = vmul.f32 %v216, %v229
        %v234 = vmul.f32 %v219, %v229
        %v235 = vmul.f32 %v222, %v229
        %v236 = vmul.f32 %v225, %v229
        %v237 = vmul.f32 %v228, %v229
        %v238 = vld [vmem:[%s1] sm:$0xff]
        %v239 = vld [vmem:[%s1 + $0x8] sm:$0xff]
        %v240 = vld [vmem:[%s1 + $0x10] sm:$0xff]
        %v241 = vld [vmem:[%s1 + $0x18] sm:$0xff]
        %v242 = vld [vmem:[%s1 + $0x20] sm:$0xff]
        %v243 = vld [vmem:[%s1 + $0x28] sm:$0xff]
        %v244 = vld [vmem:[%s1 + $0x30] sm:$0xff]
        %v245 = vld [vmem:[%s1 + $0x38] sm:$0xff]
        %v254 = vlaneseq
        %v255 = vand.u32 %v254, 127
        %v256 = vlaneseq
        %v257 = vshrl.u32 %v256, 7
        %v258 = vsub.s32 %v255, %v257
        %v259 = vrot.slane %v230, %v258
        %v260 = vadd.s32 %v255, 4294967288
        %v261 = vlaneseq
        %v262 = vshrl.u32 %v261, 7
        %v263 = vsub.s32 %v260, %v262
        %v264 = vrot.slane %v231, %v263
        %vm265 = vcmask 130112
        %v266 = vsel %vm265, %v264, %v259
        %v267 = vadd.s32 %v255, 4294967280
        %v268 = vlaneseq
        %v269 = vshrl.u32 %v268, 7
        %v270 = vsub.s32 %v267, %v269
        %v271 = vrot.slane %v232, %v270
        %vm272 = vcmask 195712
        %v273 = vsel %vm272, %v271, %v266
        %v274 = vadd.s32 %v255, 4294967272
        %v275 = vlaneseq
        %v276 = vshrl.u32 %v275, 7
        %v277 = vsub.s32 %v274, %v276
        %v278 = vrot.slane %v233, %v277
        %vm279 = vcmask 261312
        %v280 = vsel %vm279, %v278, %v273
        %v281 = vadd.s32 %v255, 4294967264
        %v282 = vlaneseq
        %v283 = vshrl.u32 %v282, 7
        %v284 = vsub.s32 %v281, %v283
        %v285 = vrot.slane %v234, %v284
        %vm286 = vcmask 326912
        %v287 = vsel %vm286, %v285, %v280
        %v288 = vadd.s32 %v255, 4294967256
        %v289 = vlaneseq
        %v290 = vshrl.u32 %v289, 7
        %v291 = vsub.s32 %v288, %v290
        %v292 = vrot.slane %v235, %v291
        %vm293 = vcmask 392512
        %v294 = vsel %vm293, %v292, %v287
        %v295 = vadd.s32 %v255, 4294967248
        %v296 = vlaneseq
        %v297 = vshrl.u32 %v296, 7
        %v298 = vsub.s32 %v295, %v297
        %v299 = vrot.slane %v236, %v298
        %vm300 = vcmask 458112
        %v301 = vsel %vm300, %v299, %v294
        %v302 = vadd.s32 %v255, 4294967240
        %v303 = vlaneseq
        %v304 = vshrl.u32 %v303, 7
        %v305 = vsub.s32 %v302, %v304
        %v306 = vrot.slane %v237, %v305
        %vm307 = vcmask 523712
        %v308 = vsel %vm307, %v306, %v301
        %vm309 = vcmask 523264
        %v310 = vsel %vm309, %v308, 0
        %312 = vmatprep.subr.mxu0 0.0
        %313 = vmatpush1.msra.mxu0 %v238
        %314 = vmatprep.subr.mxu0 0.0
        %315 = vmatpush1.msra.mxu0 %v239
        %316 = vmatprep.subr.mxu0 0.0
        %317 = vmatpush1.msra.mxu0 %v240
        %318 = vmatprep.subr.mxu0 0.0
        %319 = vmatpush1.msra.mxu0 %v241
        %320 = vmatprep.subr.mxu0 0.0
        %321 = vmatpush1.msra.mxu0 %v242
        %322 = vmatprep.subr.mxu0 0.0
        %323 = vmatpush1.msra.mxu0 %v243
        %324 = vmatprep.subr.mxu0 0.0
        %325 = vmatpush1.msra.mxu0 %v244
        %326 = vmatprep.subr.mxu0 0.0
        %327 = vmatpush1.msra.mxu0 %v245
        %328 = vmatprep.subr.mxu0 0.0
        %329 = vmatpush1.msra.mxu0 0.0
        %330 = vmatprep.subr.mxu0 0.0
        %331 = vmatpush1.msra.mxu0 0.0
        %332 = vmatprep.subr.mxu0 0.0
        %333 = vmatpush1.msra.mxu0 0.0
        %334 = vmatprep.subr.mxu0 0.0
        %335 = vmatpush1.msra.mxu0 0.0
        %336 = vmatprep.subr.mxu0 0.0
        %337 = vmatpush1.msra.mxu0 0.0
        %338 = vmatprep.subr.mxu0 0.0
        %339 = vmatpush1.msra.mxu0 0.0
        %340 = vmatprep.subr.mxu0 0.0
        %341 = vmatpush1.msra.mxu0 0.0
        %342 = vmatprep.subr.mxu0 0.0
        %343 = vmatpush1.msra.mxu0 0.0
        %344 = vmatprep.subr.mxu0 0.0
        %345 = vmatpush1.msra.mxu0 0.0
        %346 = vmatprep.subr.mxu0 0.0
        %347 = vmatpush1.msra.mxu0 0.0
        %348 = vmatprep.subr.mxu0 0.0
        %349 = vmatpush1.msra.mxu0 0.0
        %350 = vmatprep.subr.mxu0 0.0
        %351 = vmatpush1.msra.mxu0 0.0
        %352 = vmatprep.subr.mxu0 0.0
        %353 = vmatpush1.msra.mxu0 0.0
        %354 = vmatprep.subr.mxu0 0.0
        %355 = vmatpush1.msra.mxu0 0.0
        %356 = vmatprep.subr.mxu0 0.0
        %357 = vmatpush1.msra.mxu0 0.0
        %358 = vmatprep.subr.mxu0 0.0
        %359 = vmatpush1.msra.mxu0 0.0
        %360 = vmatprep.subr.mxu0 0.0
        %361 = vmatpush1.msra.mxu0 0.0
        %362 = vmatprep.subr.mxu0 0.0
        %363 = vmatpush1.msra.mxu0 0.0
        %364 = vmatprep.subr.mxu0 0.0
        %365 = vmatpush1.msra.mxu0 0.0
        %366 = vmatprep.subr.mxu0 0.0
        %367 = vmatpush1.msra.mxu0 0.0
        %368 = vmatprep.subr.mxu0 0.0
        %369 = vmatpush1.msra.mxu0 0.0
        %370 = vmatprep.subr.mxu0 0.0
        %371 = vmatpush1.msra.mxu0 0.0
        %372 = vmatprep.subr.mxu0 0.0
        %373 = vmatpush1.msra.mxu0 0.0
        %374 = vmatprep.subr.mxu0 0.0
        %375 = vmatpush1.msra.mxu0 0.0
        %376 = vmatprep.mubr.f32.mxu0 0.0
        %377 = vmatmul.mubr.f32.gmra.mrb[0].mxu0 %v310
        %v378 = vpop.f32.mrb[0].mxu0
        %v379 = vadd.f32 0.0, %v378
        %v380 = vpop.f32.mrb[0].mxu0
        %381 = vdwg.mxu0
        %v382 = vmax.f32 %v379, 0.0
        %v383 = vld [vmem:[%s2] sm:$0xf]
        %vm384 = vcmask 31744
        %v386 = vsel %vm384, %v382, 0
        %vm388 = vcmask 1043456
        %v390 = vsel %vm388, %v383, 0
        %392 = vmatprep.subr.mxu0 0.0
        %393 = vmatpush1.msra.mxu0 %v390
        %394 = vmatprep.subr.mxu0 0.0
        %395 = vmatpush1.msra.mxu0 0.0
        %396 = vmatprep.subr.mxu0 0.0
        %397 = vmatpush1.msra.mxu0 0.0
        %398 = vmatprep.subr.mxu0 0.0
        %399 = vmatpush1.msra.mxu0 0.0
        %400 = vmatprep.subr.mxu0 0.0
        %401 = vmatpush1.msra.mxu0 0.0
        %402 = vmatprep.subr.mxu0 0.0
        %403 = vmatpush1.msra.mxu0 0.0
        %404 = vmatprep.subr.mxu0 0.0
        %405 = vmatpush1.msra.mxu0 0.0
        %406 = vmatprep.subr.mxu0 0.0
        %407 = vmatpush1.msra.mxu0 0.0
        %408 = vmatprep.subr.mxu0 0.0
        %409 = vmatpush1.msra.mxu0 0.0
        %410 = vmatprep.subr.mxu0 0.0
        %411 = vmatpush1.msra.mxu0 0.0
        %412 = vmatprep.subr.mxu0 0.0
        %413 = vmatpush1.msra.mxu0 0.0
        %414 = vmatprep.subr.mxu0 0.0
        %415 = vmatpush1.msra.mxu0 0.0
        %416 = vmatprep.subr.mxu0 0.0
        %417 = vmatpush1.msra.mxu0 0.0
        %418 = vmatprep.subr.mxu0 0.0
        %419 = vmatpush1.msra.mxu0 0.0
        %420 = vmatprep.subr.mxu0 0.0
        %421 = vmatpush1.msra.mxu0 0.0
        %422 = vmatprep.subr.mxu0 0.0
        %423 = vmatpush1.msra.mxu0 0.0
        %424 = vmatprep.subr.mxu0 0.0
        %425 = vmatpush1.msra.mxu0 0.0
        %426 = vmatprep.subr.mxu0 0.0
        %427 = vmatpush1.msra.mxu0 0.0
        %428 = vmatprep.subr.mxu0 0.0
        %429 = vmatpush1.msra.mxu0 0.0
        %430 = vmatprep.subr.mxu0 0.0
        %431 = vmatpush1.msra.mxu0 0.0
        %432 = vmatprep.subr.mxu0 0.0
        %433 = vmatpush1.msra.mxu0 0.0
        %434 = vmatprep.subr.mxu0 0.0
        %435 = vmatpush1.msra.mxu0 0.0
        %436 = vmatprep.subr.mxu0 0.0
        %437 = vmatpush1.msra.mxu0 0.0
        %438 = vmatprep.subr.mxu0 0.0
        %439 = vmatpush1.msra.mxu0 0.0
        %440 = vmatprep.subr.mxu0 0.0
        %441 = vmatpush1.msra.mxu0 0.0
        %442 = vmatprep.subr.mxu0 0.0
        %443 = vmatpush1.msra.mxu0 0.0
        %444 = vmatprep.subr.mxu0 0.0
        %445 = vmatpush1.msra.mxu0 0.0
        %446 = vmatprep.subr.mxu0 0.0
        %447 = vmatpush1.msra.mxu0 0.0
        %448 = vmatprep.subr.mxu0 0.0
        %449 = vmatpush1.msra.mxu0 0.0
        %450 = vmatprep.subr.mxu0 0.0
        %451 = vmatpush1.msra.mxu0 0.0
        %452 = vmatprep.subr.mxu0 0.0
        %453 = vmatpush1.msra.mxu0 0.0
        %454 = vmatprep.subr.mxu0 0.0
        %455 = vmatpush1.msra.mxu0 0.0
        %456 = vmatprep.mubr.f32.mxu0 0.0
        %457 = vmatmul.mubr.f32.gmra.mrb[0].mxu0 %v386
        %v458 = vpop.f32.mrb[0].mxu0
        %v459 = vadd.f32 0.0, %v458
        %v460 = vpop.f32.mrb[0].mxu0
        %461 = vdwg.mxu0
        %v462 = vxor.u32 %v459, 2147483648
        %v463 = vmul.f32 %v462, 1.442695
        %v464 = vpow.pop %v463
        %v465 = vadd.f32 %v464, 1.0
        %v466 = vrcp.pop %v465
        %v467 = vmul.f32 1.0, %v466
        %v468 = vlaneseq
        %v469 = vshrl.u32 %v468, 7
        %v470 = vsub.s32 0, %v469
        %v471 = vrot.slane %v467, %v470
        %473 = vbcast.lane.b32.xlu0 %v471, 256
        %v474 = vpop.permute.xlu0 %473
        %s476 = sor.u32 256, 8
        %477 = vbcast.lane.b32.xlu0 %v471, %s476
        %v478 = vpop.permute.xlu0 %477
        %s480 = sor.u32 256, 16
        %481 = vbcast.lane.b32.xlu0 %v471, %s480
        %v482 = vpop.permute.xlu0 %481
        %s484 = sor.u32 256, 24
        %485 = vbcast.lane.b32.xlu0 %v471, %s484
        %v486 = vpop.permute.xlu0 %485
        %s488 = sor.u32 256, 32
        %489 = vbcast.lane.b32.xlu0 %v471, %s488
        %v490 = vpop.permute.xlu0 %489
        %s492 = sor.u32 256, 40
        %493 = vbcast.lane.b32.xlu0 %v471, %s492
        %v494 = vpop.permute.xlu0 %493
        %s496 = sor.u32 256, 48
        %497 = vbcast.lane.b32.xlu0 %v471, %s496
        %v498 = vpop.permute.xlu0 %497
        %s500 = sor.u32 256, 56
        %501 = vbcast.lane.b32.xlu0 %v471, %s500
        %v502 = vpop.permute.xlu0 %501
        %v503 = vmul.f32 %v189, %v474
        %v504 = vmul.f32 %v190, %v474
        %v505 = vmul.f32 %v191, %v478
        %v506 = vmul.f32 %v192, %v478
        %v507 = vmul.f32 %v193, %v482
        %v508 = vmul.f32 %v194, %v482
        %v509 = vmul.f32 %v195, %v486
        %v510 = vmul.f32 %v196, %v486
        %v511 = vmul.f32 %v197, %v490
        %v512 = vmul.f32 %v198, %v490
        %v513 = vmul.f32 %v199, %v494
        %v514 = vmul.f32 %v200, %v494
        %v515 = vmul.f32 %v201, %v498
        %v516 = vmul.f32 %v202, %v498
        %v517 = vmul.f32 %v203, %v502
        %v518 = vmul.f32 %v204, %v502
        %519 = vst [vmem:[%s188] sm:$0xff] %v503
        %520 = vst [vmem:[%s188 + $0x8] sm:$0xff] %v504
        %521 = vst [vmem:[%s188 + $0x10] sm:$0xff] %v505
        %522 = vst [vmem:[%s188 + $0x18] sm:$0xff] %v506
        %523 = vst [vmem:[%s188 + $0x20] sm:$0xff] %v507
        %524 = vst [vmem:[%s188 + $0x28] sm:$0xff] %v508
        %525 = vst [vmem:[%s188 + $0x30] sm:$0xff] %v509
        %526 = vst [vmem:[%s188 + $0x38] sm:$0xff] %v510
        %527 = vst [vmem:[%s188 + $0x40] sm:$0xff] %v511
        %528 = vst [vmem:[%s188 + $0x48] sm:$0xff] %v512
        %529 = vst [vmem:[%s188 + $0x50] sm:$0xff] %v513
        %530 = vst [vmem:[%s188 + $0x58] sm:$0xff] %v514
        %531 = vst [vmem:[%s188 + $0x60] sm:$0xff] %v515
        %532 = vst [vmem:[%s188 + $0x68] sm:$0xff] %v516
        %533 = vst [vmem:[%s188 + $0x70] sm:$0xff] %v517
        %534 = vst [vmem:[%s188 + $0x78] sm:$0xff] %v518
        %s535 = sand.u32 %s96, 1
        %s536 = scalar_lea.sflag [#allocation4], %s535
        %s537 = sand.u32 %s96, 1
        %s538 = smul.addr %s537, 128
        %s539 = scalar_lea.vmem [#allocation5], %s538
        // Predicated region
        $region37: #{tpu_custom_call.1} parent=31 // pred_check
          %p540 = pneg %p106
        $region38: #{tpu_custom_call.1} parent=31 // pred_check_branch
          %542 = sbr.rel (%p540) target = $region40
        $region39: #{tpu_custom_call.1} parent=31 // pred_region
          %s544 = ssub.s32 2048, 2048
          %545 = vsyncadd %s536, %s544
          %s546 = smul.addr %s20, 16
          %s547 = smul.addr %s546, 128
          %s548 = scalar_lea.hbm %s3, %s547
          %s549 = sshll.u32 %s539, 4
          %s550 = int_to_ptr.vmem [resolvable:$true] %s549
          %555 = dma.vmem_to_hbm [thread:$0]  %s550, 2048, %s548, %s536, 256, 256, 16
        $region40: #{tpu_custom_call.1} parent=31 // pred_fallthru
          _
      $region32: #{tpu_custom_call.1} parent=5 // pred_fallthru
        _
      %p556 = scmp.le.s32.totalorder 2, %s15
      // Predicated region
      $region41: #{tpu_custom_call.1} parent=5 // pred_check
        %p557 = pneg %p556
      $region42: #{tpu_custom_call.1} parent=5 // pred_check_branch
        %559 = sbr.rel (%p557) target = $region44
      $region43: #{tpu_custom_call.1} parent=5 // pred_region
        %s560 = ssub.s32 %s15, 2
        // Predicated region
        $region45: #{tpu_custom_call.1} parent=43 // pred_check
          %p561 = pneg %p112
        $region46: #{tpu_custom_call.1} parent=43 // pred_check_branch
          %563 = sbr.rel (%p561) target = $region48
        $region47: #{tpu_custom_call.1} parent=43 // pred_region
          %s564 = sand.u32 %s97, 1
          %s565 = scalar_lea.sflag [#allocation4], %s564
          %s566 = sand.u32 %s97, 1
          %s567 = smul.addr %s566, 128
          %s568 = scalar_lea.vmem [#allocation5], %s567
          %569 = dma.done %s565, 2048
        $region48: #{tpu_custom_call.1} parent=43 // pred_fallthru
          _
      $region44: #{tpu_custom_call.1} parent=5 // pred_fallthru
        _
    $region6: #{tpu_custom_call.1} parent=1 // loop_footer
      %s19 = sadd.s32 1, %s15
    $region7: #{tpu_custom_call.1} parent=1 // loop_footer_branch
      %14 = sbr.rel target = $region3
    $region8: #{tpu_custom_call.1} parent=1 // loop_exit
      _
    %570 = vsyncpa [#allocation3], 1
    %s571 = scalar_lea.sflag [#allocation3], 1
    %572 = vsyncpa %s571, 1
    %573 = vsyncpa [#allocation4], 1
    %s574 = scalar_lea.sflag [#allocation4], 1
    %575 = vsyncpa %s574, 1

</llo_original>
